<compile_context>
chip_gen: v7x
topology: tpu7x:2x2x1
jax: 0.10.0
libtpu: 0.0.40
codegen_flags: <defaults>
</compile_context>

<pallas_src>
import functools

import jax
import jax.numpy as jnp
from jax.experimental import pallas as pl
from jax.experimental.pallas import tpu as pltpu


def _decomp_kernel(x_ref, res_ref, mean_ref, *, kernel_size: int, seq_len: int,
                   block_b: int):
    """x_ref block: (TB, L, TC).  Sliding-window mean along L with edge clamping."""
    pad = (kernel_size - 1) // 2
    L = seq_len
    inv_k = jnp.float32(1.0 / kernel_size)
    # Small (L, 1) row iota for edge-clamp masks (broadcasts against (L, TC)).
    row = jax.lax.broadcasted_iota(jnp.int32, (L, 1), 0)
    use_prefix = pad >= 5          # O(log L) prefix-sum beats O(k) taps for big windows

    for b in range(block_b):                       # static, small unrolled loop
        xb = x_ref[b].astype(jnp.float32)          # (L, TC), cast once
        first = xb[0:1, :]                         # replicate-pad value (front)
        last = xb[L - 1:L, :]                      # replicate-pad value (end)

        if pad == 0:
            mean = xb
        elif use_prefix:
            # Hillis-Steele prefix sum along L: cs[i] = sum_{j<=i} xb[j].
            cs = xb
            off = 1
            while off < L:
                sh = pltpu.roll(cs, off, 0)        # sh[i] = cs[(i - off) % L]
                cs = cs + jnp.where(row >= off, sh, 0.0)
                off *= 2
            total = cs[L - 1:L, :]
            # upper[i] = cs[min(i + pad, L - 1)]
            up = pltpu.roll(cs, (L - pad) % L, 0)
            up = jnp.where(row >= L - pad, total, up)
            # lower[i] = cs[i - pad - 1] if i > pad else 0
            lo = pltpu.roll(cs, (pad + 1) % L, 0)
            lo = jnp.where(row >= pad + 1, lo, 0.0)
            # Edge corrections for the replicated padding values.
            left_cnt = jnp.maximum(pad - row, 0).astype(jnp.float32)
            right_cnt = jnp.maximum(row - (L - 1 - pad), 0).astype(jnp.float32)
            acc = (up - lo) + left_cnt * first + right_cnt * last
            mean = acc * inv_k
        else:
            acc = xb                               # tap d = 0
            for d in range(1, pad + 1):
                # tap +d: value at row i is x[min(i + d, L - 1)]
                fwd = pltpu.roll(xb, L - d, 0)     # fwd[i] = xb[(i + d) % L]
                fwd = jnp.where(row >= L - d, last, fwd)
                # tap -d: value at row i is x[max(i - d, 0)]
                bwd = pltpu.roll(xb, d, 0)         # bwd[i] = xb[(i - d) % L]
                bwd = jnp.where(row < d, first, bwd)
                acc = acc + fwd + bwd
            mean = acc * inv_k

        mean_ref[b] = mean.astype(mean_ref.dtype)
        res_ref[b] = (xb - mean).astype(res_ref.dtype)


def _plan_tiles(B: int, L: int, C: int, itemsize: int,
                target_bytes: int = 2 << 20, tb_cap: int = 4):
    """Pick (TB, TC).  TC == C unless C % 128 == 0 and splitting keeps blocks under
    the target; TB packs whole contiguous batch rows.  Ensures >= 2 grid steps along
    a parallel axis when possible (dual-TensorCore parts)."""
    TC = C
    if C % 128 == 0:
        m = C // 128
        fitting = [128 * d for d in range(1, m + 1)
                   if m % d == 0 and L * 128 * d * itemsize <= target_bytes]
        TC = max(fitting) if fitting else 128
    per_b = L * TC * itemsize
    divs = [d for d in range(1, min(B, tb_cap) + 1) if B % d == 0]
    fitting = [d for d in divs if d * per_b <= target_bytes]
    TB = max(fitting) if fitting else 1
    if (B // TB) * (C // TC) < 2:            # give both TensorCores work if we can
        if B >= 2:
            TB = max(d for d in divs if B // d >= 2)
        elif C % 256 == 0 and C // TC < 2:
            TC = C // 2
    return TB, TC


def series_decomp(x: jax.Array, kernel_size: int, stride: int = 1):
    """Pallas implementation of series_decomp.forward. Supports (B, L, C) and (L, C)."""
    assert stride == 1, "only stride=1 is supported (as used by series_decomp)"
    assert kernel_size % 2 == 1, "odd kernel_size required so output length == L"

    squeeze = False
    if x.ndim == 2:                      # PyTorch 2-D branch: (series_len, n_vars)
        x = x[None]
        squeeze = True
    assert x.ndim == 3, f"unsupported shape {x.shape}"

    B, L, C = x.shape
    pad = (kernel_size - 1) // 2
    assert pad < L, "window half-width must be smaller than the sequence length"

    itemsize = jnp.dtype(x.dtype).itemsize
    TB, TC = _plan_tiles(B, L, C, itemsize)
    grid = (B // TB, C // TC)
    block = (TB, L, TC)                  # L (and C when TC==C) use the full-dim
    idx = lambda b, c: (b, 0, c)         # exemption from the (8,128) rule: no padding.

    kernel = functools.partial(
        _decomp_kernel, kernel_size=kernel_size, seq_len=L, block_b=TB)

    res, mean = pl.pallas_call(
        kernel,
        out_shape=(
            jax.ShapeDtypeStruct((B, L, C), x.dtype),
            jax.ShapeDtypeStruct((B, L, C), x.dtype),
        ),
        grid_spec=pltpu.PrefetchScalarGridSpec(
            num_scalar_prefetch=0,
            grid=grid,
            in_specs=[pl.BlockSpec(block, idx)],
            out_specs=[pl.BlockSpec(block, idx), pl.BlockSpec(block, idx)],
        ),
        compiler_params=pltpu.CompilerParams(
            dimension_semantics=("parallel", "parallel"),
            vmem_limit_bytes=48 * 1024 * 1024,   # safe on v7x (64 MiB), ample headroom
        ),
    )(x)

    # TODO(synk): very long sequences with non-128-multiple C keep the whole (L, C)
    # slab in one block; an L-tiled halo variant would be needed for extreme L*C.

    if squeeze:
        res, mean = res[0], mean[0]
    return res, mean


def _reference(x, kernel_size):
    # Pure-JAX reference mirroring the PyTorch code (3-D layout).
    pad = (kernel_size - 1) // 2
    front = jnp.repeat(x[:, 0:1, :], pad, axis=1)
    end = jnp.repeat(x[:, -1:, :], pad, axis=1)
    xp = jnp.concatenate([front, x, end], axis=1)
    L = x.shape[1]
    mean = jnp.stack([xp[:, j:j + L, :] for j in range(kernel_size)], axis=0).mean(0)
    return x - mean, mean


if __name__ == "__main__":
    key = jax.random.PRNGKey(0)
    k0, k1, k2, k3 = jax.random.split(key, 4)

    def check(x, ksize):
        res, mean = series_decomp(x, ksize)
        jax.block_until_ready((res, mean))
        x3 = x[None] if x.ndim == 2 else x
        r_ref, m_ref = _reference(x3, ksize)
        if x.ndim == 2:
            r_ref, m_ref = r_ref[0], m_ref[0]
        assert jnp.allclose(mean, m_ref, atol=1e-4, rtol=1e-4), (x.shape, ksize)
        assert jnp.allclose(res, r_ref, atol=1e-4, rtol=1e-4), (x.shape, ksize)
        assert jnp.allclose(res + mean, x, atol=1e-4, rtol=1e-4), (x.shape, ksize)

    # Typical (batch, seq_len, channels) use; small C -> full-dim, unpadded blocks.
    check(jax.random.normal(k0, (2, 16, 8), dtype=jnp.float32), 5)
    # 128-multiple channel count -> lane-dense channel tiles, TB > 1, grid split on B.
    check(jax.random.normal(k1, (4, 24, 256), dtype=jnp.float32), 7)
    # Unaligned L (not %8) and C (not %128) with a large window -> prefix-sum path.
    check(jax.random.normal(k2, (2, 19, 7), dtype=jnp.float32), 11)
    # 2-D branch: (series_len, n_vars).
    check(jax.random.normal(k3, (16, 7), dtype=jnp.float32), 3)

    print("KERNEL_OK")
</pallas_src>

<mosaic_0001>
module attributes {stable_mosaic.version = 11 : i64} {
  func.func @_decomp_kernel(%arg0: i32, %arg1: i32, %arg2: memref<1x16x8xf32, #tpu.memory_space<vmem>>, %arg3: memref<1x16x8xf32, #tpu.memory_space<vmem>>, %arg4: memref<1x16x8xf32, #tpu.memory_space<vmem>>) attributes {dimension_semantics = [#tpu.dimension_semantics<parallel>, #tpu.dimension_semantics<parallel>], iteration_bounds = array<i64: 2, 1>, scalar_prefetch = 0 : i64, scratch_operands = 0 : i64, tpu.core_type = #tpu.core_type<tc>, window_params = [{transform_indices = @transform_0, window_bounds = array<i64: 1, 16, 8>}, {transform_indices = @transform_1, window_bounds = array<i64: 1, 16, 8>}, {transform_indices = @transform_2, window_bounds = array<i64: 1, 16, 8>}]} {
    %0 = tpu.iota {dimensions = array<i32: 0>} : vector<16x1xi32>
    %c0 = arith.constant 0 : index
    %c0_0 = arith.constant 0 : index
    %c0_1 = arith.constant 0 : index
    %1 = vector.load %arg2[%c0, %c0_0, %c0_1] : memref<1x16x8xf32, #tpu.memory_space<vmem>>, vector<1x16x8xf32>
    %2 = vector.shape_cast %1 : vector<1x16x8xf32> to vector<16x8xf32>
    %3 = vector.extract_strided_slice %2 {offsets = [0, 0], sizes = [1, 8], strides = [1, 1]} : vector<16x8xf32> to vector<1x8xf32>
    %4 = vector.extract_strided_slice %2 {offsets = [15, 0], sizes = [1, 8], strides = [1, 1]} : vector<16x8xf32> to vector<1x8xf32>
    %c15_i32 = arith.constant 15 : i32
    %5 = tpu.dynamic_rotate %2 by %c15_i32 dim 0 : vector<16x8xf32>, i32 -> vector<16x8xf32>
    %c15_i32_2 = arith.constant 15 : i32
    %6 = vector.broadcast %c15_i32_2 : i32 to vector<16x1xi32>
    %7 = arith.cmpi sge, %0, %6 : vector<16x1xi32>
    %8 = vector.shape_cast %7 : vector<16x1xi1> to vector<16x1xi1>
    %9 = vector.broadcast %8 : vector<16x1xi1> to vector<16x8xi1>
    %10 = vector.shape_cast %4 : vector<1x8xf32> to vector<1x8xf32>
    %11 = vector.broadcast %10 : vector<1x8xf32> to vector<16x8xf32>
    %12 = arith.select %9, %11, %5 : vector<16x8xi1>, vector<16x8xf32>
    %c1_i32 = arith.constant 1 : i32
    %13 = tpu.dynamic_rotate %2 by %c1_i32 dim 0 : vector<16x8xf32>, i32 -> vector<16x8xf32>
    %c1_i32_3 = arith.constant 1 : i32
    %14 = vector.broadcast %c1_i32_3 : i32 to vector<16x1xi32>
    %15 = arith.cmpi slt, %0, %14 : vector<16x1xi32>
    %16 = vector.shape_cast %15 : vector<16x1xi1> to vector<16x1xi1>
    %17 = vector.broadcast %16 : vector<16x1xi1> to vector<16x8xi1>
    %18 = vector.shape_cast %3 : vector<1x8xf32> to vector<1x8xf32>
    %19 = vector.broadcast %18 : vector<1x8xf32> to vector<16x8xf32>
    %20 = arith.select %17, %19, %13 : vector<16x8xi1>, vector<16x8xf32>
    %21 = arith.addf %2, %12 : vector<16x8xf32>
    %22 = arith.addf %21, %20 : vector<16x8xf32>
    %c14_i32 = arith.constant 14 : i32
    %23 = tpu.dynamic_rotate %2 by %c14_i32 dim 0 : vector<16x8xf32>, i32 -> vector<16x8xf32>
    %c14_i32_4 = arith.constant 14 : i32
    %24 = vector.broadcast %c14_i32_4 : i32 to vector<16x1xi32>
    %25 = arith.cmpi sge, %0, %24 : vector<16x1xi32>
    %26 = vector.shape_cast %25 : vector<16x1xi1> to vector<16x1xi1>
    %27 = vector.broadcast %26 : vector<16x1xi1> to vector<16x8xi1>
    %28 = vector.shape_cast %4 : vector<1x8xf32> to vector<1x8xf32>
    %29 = vector.broadcast %28 : vector<1x8xf32> to vector<16x8xf32>
    %30 = arith.select %27, %29, %23 : vector<16x8xi1>, vector<16x8xf32>
    %c2_i32 = arith.constant 2 : i32
    %31 = tpu.dynamic_rotate %2 by %c2_i32 dim 0 : vector<16x8xf32>, i32 -> vector<16x8xf32>
    %c2_i32_5 = arith.constant 2 : i32
    %32 = vector.broadcast %c2_i32_5 : i32 to vector<16x1xi32>
    %33 = arith.cmpi slt, %0, %32 : vector<16x1xi32>
    %34 = vector.shape_cast %33 : vector<16x1xi1> to vector<16x1xi1>
    %35 = vector.broadcast %34 : vector<16x1xi1> to vector<16x8xi1>
    %36 = vector.shape_cast %3 : vector<1x8xf32> to vector<1x8xf32>
    %37 = vector.broadcast %36 : vector<1x8xf32> to vector<16x8xf32>
    %38 = arith.select %35, %37, %31 : vector<16x8xi1>, vector<16x8xf32>
    %39 = arith.addf %22, %30 : vector<16x8xf32>
    %40 = arith.addf %39, %38 : vector<16x8xf32>
    %cst = arith.constant 2.000000e-01 : f32
    %41 = vector.broadcast %cst : f32 to vector<16x8xf32>
    %42 = arith.mulf %40, %41 : vector<16x8xf32>
    %c0_6 = arith.constant 0 : index
    %c0_7 = arith.constant 0 : index
    %c0_8 = arith.constant 0 : index
    %43 = vector.load %arg4[%c0_6, %c0_7, %c0_8] : memref<1x16x8xf32, #tpu.memory_space<vmem>>, vector<1x16x8xf32>
    %44 = vector.shape_cast %43 : vector<1x16x8xf32> to vector<16x8xf32>
    %45 = vector.shape_cast %42 : vector<16x8xf32> to vector<1x16x8xf32>
    tpu.vector_store %arg4[%c0_6, %c0_7, %c0_8], %45 {strides = array<i32>} : memref<1x16x8xf32, #tpu.memory_space<vmem>>, vector<1x16x8xf32>,
    %46 = arith.subf %2, %42 : vector<16x8xf32>
    %c0_9 = arith.constant 0 : index
    %c0_10 = arith.constant 0 : index
    %c0_11 = arith.constant 0 : index
    %47 = vector.load %arg3[%c0_9, %c0_10, %c0_11] : memref<1x16x8xf32, #tpu.memory_space<vmem>>, vector<1x16x8xf32>
    %48 = vector.shape_cast %47 : vector<1x16x8xf32> to vector<16x8xf32>
    %49 = vector.shape_cast %46 : vector<16x8xf32> to vector<1x16x8xf32>
    tpu.vector_store %arg3[%c0_9, %c0_10, %c0_11], %49 {strides = array<i32>} : memref<1x16x8xf32, #tpu.memory_space<vmem>>, vector<1x16x8xf32>,
    return
  }
  func.func @transform_0(%arg0: i32, %arg1: i32) -> (i32, i32, i32) {
    %c0_i32 = arith.constant 0 : i32
    %c0_i32_0 = arith.constant 0 : i32
    return %arg0, %c0_i32, %arg1 : i32, i32, i32
  }
  func.func @transform_1(%arg0: i32, %arg1: i32) -> (i32, i32, i32) {
    %c0_i32 = arith.constant 0 : i32
    %c0_i32_0 = arith.constant 0 : i32
    return %arg0, %c0_i32, %arg1 : i32, i32, i32
  }
  func.func @transform_2(%arg0: i32, %arg1: i32) -> (i32, i32, i32) {
    %c0_i32 = arith.constant 0 : i32
    %c0_i32_0 = arith.constant 0 : i32
    return %arg0, %c0_i32, %arg1 : i32, i32, i32
  }
}

</mosaic_0001>

<llo_original>
// kernel: tpu_custom_call.1
$region0: #{tpu_custom_call.1}
  #allocation0 [shape = 'u32[]', space=smem, size = 0x4, offset = 0x4, fixed_abs, tag = 'smem constant byte address 0x4 - core index']
  #allocation1 [shape = 'u32[144,128]{1,0:T(1,128)}', space=vmem, size = 0x12000, scoped, tag = 'internal scratch']
  %s0 = inlined_call_operand.vmem [shape: f32[2,16,8], index: 0, kind: input, shape index: {}]
  %s1 = inlined_call_operand.vmem [shape: f32[2,16,8], index: 1, kind: output, shape index: {0}]
  %s2 = inlined_call_operand.vmem [shape: f32[2,16,8], index: 2, kind: output, shape index: {1}]
  %3 = xla_tuple %s1, %s2
  %s4 = sld [smem:[#allocation0]]
  $region45: #{tpu_custom_call.1} parent=0
    _
  %s6 = ssub.s32 1, %s4
  %s7 = scalar_select 0, %s6, %s4
  loop: start=0, step=1, limit=4
  $region2: #{tpu_custom_call.1} parent=0 // loop_pre_header
    _
  $region3: #{tpu_custom_call.1} parent=0 // loop_header
    %s9 = sphi 0, %s13
    %p10 = scmp.ge.s32.totalorder %s9, 4
    %s16 = sphi 0, %s28
    %s17 = sphi 0, %s24
    %s18 = sphi 0, %s16
    %s19 = sphi 0, %s17
    %s20 = sphi 0, %s18
    %s21 = sphi 0, %s19
    %s33 = sphi 0, %s35
    %s36 = sphi 0, %s33
    %s37 = sphi 0, %s36
    %s53 = sphi 0, %s37
    %s61 = sphi 0, %s63
    %s64 = sphi 0, %s61
    %s65 = sphi 0, %s64
    %s81 = sphi 0, %s65
    %s89 = sphi 0, %s91
    %s92 = sphi 0, %s89
    %s93 = sphi 0, %s92
    %s109 = sphi 0, %s93
  $region4: #{tpu_custom_call.1} parent=0 // loop_header_branch
    %12 = sbr.rel (%p10) target = $region8
  $region5: #{tpu_custom_call.1} parent=0 // loop_body
    %s14 = ssub.s32 %s9, 1
    %s15 = ssub.s32 %s9, 2
    %s22 = sadd.s32 1, %s17
    %p23 = scmp.ge.s32.totalorder %s22, 1
    %s24 = scalar_select %p23, 0, %s22
    %s25 = sadd.s32 1, %s16
    %s26 = scalar_select %p23, %s25, %s16
    %p27 = scmp.ge.s32.totalorder %s26, 2
    %s28 = scalar_select %p27, 0, %s26
    %s29 = ssub.s32 %s16, %s28
    %s30 = ssub.s32 %s17, %s24
    %s31 = sor.u32 %s29, %s30
    %p32 = scmp.eq.s32.totalorder %s31, 0
    %s34 = sadd.s32 %s33, 1
    %s35 = scalar_select %p32, %s33, %s34
    %p38 = pneg %p32
    %p39 = scmp.eq.s32.totalorder %s9, 1
    %p40 = por %p38, %p39
    %p41 = scmp.ne.s32.totalorder %s33, %s36
    %p42 = scmp.eq.s32.totalorder %s9, 0
    %p43 = por %p41, %p42
    %p44 = scmp.ne.s32.totalorder %s33, %s36
    %p45 = scmp.eq.s32.totalorder %s14, 1
    %p46 = por %p44, %p45
    %p47 = scmp.ne.s32.totalorder %s36, %s37
    %p48 = scmp.eq.s32.totalorder %s14, 0
    %p49 = por %p47, %p48
    %p50 = scmp.ne.s32.totalorder %s36, %s37
    %p51 = scmp.eq.s32.totalorder %s15, 1
    %p52 = por %p50, %p51
    %p54 = scmp.ne.s32.totalorder %s37, %s53
    %p55 = scmp.eq.s32.totalorder %s15, 0
    %p56 = por %p54, %p55
    %s57 = ssub.s32 %s16, %s28
    %s58 = ssub.s32 %s17, %s24
    %s59 = sor.u32 %s57, %s58
    %p60 = scmp.eq.s32.totalorder %s59, 0
    %s62 = sadd.s32 %s61, 1
    %s63 = scalar_select %p60, %s61, %s62
    %p66 = pneg %p60
    %p67 = scmp.eq.s32.totalorder %s9, 1
    %p68 = por %p66, %p67
    %p69 = scmp.ne.s32.totalorder %s61, %s64
    %p70 = scmp.eq.s32.totalorder %s9, 0
    %p71 = por %p69, %p70
    %p72 = scmp.ne.s32.totalorder %s61, %s64
    %p73 = scmp.eq.s32.totalorder %s14, 1
    %p74 = por %p72, %p73
    %p75 = scmp.ne.s32.totalorder %s64, %s65
    %p76 = scmp.eq.s32.totalorder %s14, 0
    %p77 = por %p75, %p76
    %p78 = scmp.ne.s32.totalorder %s64, %s65
    %p79 = scmp.eq.s32.totalorder %s15, 1
    %p80 = por %p78, %p79
    %p82 = scmp.ne.s32.totalorder %s65, %s81
    %p83 = scmp.eq.s32.totalorder %s15, 0
    %p84 = por %p82, %p83
    %s85 = ssub.s32 %s16, %s28
    %s86 = ssub.s32 %s17, %s24
    %s87 = sor.u32 %s85, %s86
    %p88 = scmp.eq.s32.totalorder %s87, 0
    %s90 = sadd.s32 %s89, 1
    %s91 = scalar_select %p88, %s89, %s90
    %p94 = pneg %p88
    %p95 = scmp.eq.s32.totalorder %s9, 1
    %p96 = por %p94, %p95
    %p97 = scmp.ne.s32.totalorder %s89, %s92
    %p98 = scmp.eq.s32.totalorder %s9, 0
    %p99 = por %p97, %p98
    %p100 = scmp.ne.s32.totalorder %s89, %s92
    %p101 = scmp.eq.s32.totalorder %s14, 1
    %p102 = por %p100, %p101
    %p103 = scmp.ne.s32.totalorder %s92, %s93
    %p104 = scmp.eq.s32.totalorder %s14, 0
    %p105 = por %p103, %p104
    %p106 = scmp.ne.s32.totalorder %s92, %s93
    %p107 = scmp.eq.s32.totalorder %s15, 1
    %p108 = por %p106, %p107
    %p110 = scmp.ne.s32.totalorder %s93, %s109
    %p111 = scmp.eq.s32.totalorder %s15, 0
    %p112 = por %p110, %p111
    %p113 = scmp.le.s32.totalorder 1, %s9
    %p114 = scmp.lt.s32.totalorder %s9, 3
    %p115 = pnand %p113, %p114
    %p116 = pneg %p115
    // Predicated region
    $region9: #{tpu_custom_call.1} parent=5 // pred_check
      _
    $region10: #{tpu_custom_call.1} parent=5 // pred_check_branch
      %118 = sbr.rel (%p115) target = $region12
    $region11: #{tpu_custom_call.1} parent=5 // pred_region
      %s119 = ssub.s32 %s9, 1
    $region12: #{tpu_custom_call.1} parent=5 // pred_fallthru
      _
    %p120 = scmp.lt.s32.totalorder %s9, 2
    // Predicated region
    $region13: #{tpu_custom_call.1} parent=5 // pred_check
      %p121 = pneg %p120
    $region14: #{tpu_custom_call.1} parent=5 // pred_check_branch
      %123 = sbr.rel (%p121) target = $region16
    $region15: #{tpu_custom_call.1} parent=5 // pred_region
      // Predicated region
      $region17: #{tpu_custom_call.1} parent=15 // pred_check
        %p124 = pneg %p43
      $region18: #{tpu_custom_call.1} parent=15 // pred_check_branch
        %126 = sbr.rel (%p124) target = $region20
      $region19: #{tpu_custom_call.1} parent=15 // pred_region
        %p127 = scmp.lt.s32.totalorder %s16, 1
        %s128 = scalar_select %p127, %s16, 1
        %p129 = scmp.lt.s32.totalorder %s17, 0
        %s130 = scalar_select %p129, %s17, 0
        %s131 = smul.addr %s128, 2
        %s132 = sadd.s32 %s130, %s131
        %s133 = smul.addr %s132, 8
        %s134 = scalar_lea.vmem %s0, %s133
      $region20: #{tpu_custom_call.1} parent=15 // pred_fallthru
        _
    $region16: #{tpu_custom_call.1} parent=5 // pred_fallthru
      _
    %p135 = scmp.le.s32.totalorder 1, %s9
    %p136 = scmp.lt.s32.totalorder %s9, 3
    %p137 = pnand %p135, %p136
    %p138 = pneg %p137
    // Predicated region
    $region21: #{tpu_custom_call.1} parent=5 // pred_check
      _
    $region22: #{tpu_custom_call.1} parent=5 // pred_check_branch
      %140 = sbr.rel (%p137) target = $region24
    $region23: #{tpu_custom_call.1} parent=5 // pred_region
      %s141 = ssub.s32 %s9, 1
      %p142 = scmp.lt.s32.totalorder %s18, 1
      %s143 = scalar_select %p142, %s18, 1
      %p144 = scmp.lt.s32.totalorder %s19, 0
      %s145 = scalar_select %p144, %s19, 0
      %s146 = smul.addr %s143, 2
      %s147 = sadd.s32 %s145, %s146
      %s148 = smul.addr %s147, 8
      %s149 = scalar_lea.vmem %s0, %s148
      %p150 = pneg %p49
      %p151 = pneg %p46
      %p152 = pneg %p77
      %p153 = pneg %p74
      %p154 = scmp.lt.s32.totalorder %s18, 1
      %s155 = scalar_select %p154, %s18, 1
      %p156 = scmp.lt.s32.totalorder %s19, 0
      %s157 = scalar_select %p156, %s19, 0
      %s158 = smul.addr %s155, 2
      %s159 = sadd.s32 %s157, %s158
      %s160 = smul.addr %s159, 8
      %s161 = scalar_lea.vmem %s1, %s160
      %p162 = pneg %p105
      %p163 = pneg %p102
      %p164 = scmp.lt.s32.totalorder %s18, 1
      %s165 = scalar_select %p164, %s18, 1
      %p166 = scmp.lt.s32.totalorder %s19, 0
      %s167 = scalar_select %p166, %s19, 0
      %s168 = smul.addr %s165, 2
      %s169 = sadd.s32 %s167, %s168
      %s170 = smul.addr %s169, 8
      %s171 = scalar_lea.vmem %s2, %s170
      %p172 = scmp.lt.s32.totalorder %s18, 1
      %s173 = scalar_select %p172, %s18, 1
      %p174 = scmp.lt.s32.totalorder %s19, 0
      %s175 = scalar_select %p174, %s19, 0
      %s176 = smul.addr %s173, 2
      %s177 = sadd.s32 %s175, %s176
      %s178 = smul.addr %s177, 8
      %s179 = scalar_lea.vmem %s0, %s178
      %p180 = scmp.lt.s32.totalorder %s18, 1
      %s181 = scalar_select %p180, %s18, 1
      %p182 = scmp.lt.s32.totalorder %s19, 0
      %s183 = scalar_select %p182, %s19, 0
      %s184 = smul.addr %s181, 2
      %s185 = sadd.s32 %s183, %s184
      %s186 = smul.addr %s185, 8
      %s187 = scalar_lea.vmem %s1, %s186
      %p188 = scmp.lt.s32.totalorder %s18, 1
      %s189 = scalar_select %p188, %s18, 1
      %p190 = scmp.lt.s32.totalorder %s19, 0
      %s191 = scalar_select %p190, %s19, 0
      %s192 = smul.addr %s189, 2
      %s193 = sadd.s32 %s191, %s192
      %s194 = smul.addr %s193, 8
      %s195 = scalar_lea.vmem %s2, %s194
      %v196 = vlaneseq
      %v197 = vshrl.u32 %v196, 7
      %v198 = vadd.s32 %v197, 8
      %v199 = vld [vmem:[%s179] sm:$0xff]
      %v200 = vld [vmem:[%s179 + $0x8] sm:$0xff]
      %v201 = vrot.slane %v199, 1
      %v202 = vrot.slane %v200, 1
      %vm203 = vcmp.lt.s32.totalorder %v197, 7
      %v204 = vsel %vm203, %v201, %v202
      %v205 = vsel %vm203, %v202, %v201
      %vm206 = vcmp.ge.s32.totalorder %v197, 15
      %vm207 = vcmp.ge.s32.totalorder %v198, 15
      %v208 = vsel %vm206, 1, 0
      %v209 = vsel %vm207, 1, 0
      %vm210 = vcmp.eq.s32.totalorder %v208, 1
      %vm211 = vcmp.eq.s32.totalorder %v209, 1
      %v212 = vlaneseq
      %v213 = vshrl.u32 %v212, 7
      %v214 = vsub.s32 7, %v213
      %v215 = vrot.slane %v200, %v214
      %v216 = vsel %vm210, %v215, %v204
      %v217 = vsel %vm211, %v215, %v205
      %v218 = vrot.slane %v199, 7
      %v219 = vrot.slane %v200, 7
      %vm220 = vcmp.lt.s32.totalorder %v197, 1
      %v221 = vsel %vm220, %v218, %v219
      %v222 = vsel %vm220, %v219, %v218
      %vm223 = vcmp.lt.s32.totalorder %v198, 1
      %v224 = vsel %vm220, 1, 0
      %v225 = vsel %vm223, 1, 0
      %vm226 = vcmp.eq.s32.totalorder %v224, 1
      %vm227 = vcmp.eq.s32.totalorder %v225, 1
      %v228 = vlaneseq
      %v229 = vshrl.u32 %v228, 7
      %v230 = vsub.s32 0, %v229
      %v231 = vrot.slane %v199, %v230
      %v232 = vsel %vm226, %v231, %v222
      %v233 = vsel %vm227, %v231, %v221
      %v234 = vadd.f32 %v199, %v216
      %v235 = vadd.f32 %v200, %v217
      %v236 = vadd.f32 %v234, %v232
      %v237 = vadd.f32 %v235, %v233
      %v238 = vrot.slane %v199, 2
      %v239 = vrot.slane %v200, 2
      %vm240 = vcmp.lt.s32.totalorder %v197, 6
      %v241 = vsel %vm240, %v238, %v239
      %v242 = vsel %vm240, %v239, %v238
      %vm243 = vcmp.ge.s32.totalorder %v197, 14
      %vm244 = vcmp.ge.s32.totalorder %v198, 14
      %v245 = vsel %vm243, 1, 0
      %v246 = vsel %vm244, 1, 0
      %vm247 = vcmp.eq.s32.totalorder %v245, 1
      %vm248 = vcmp.eq.s32.totalorder %v246, 1
      %v249 = vsel %vm247, %v215, %v241
      %v250 = vsel %vm248, %v215, %v242
      %v251 = vrot.slane %v199, 6
      %v252 = vrot.slane %v200, 6
      %vm253 = vcmp.lt.s32.totalorder %v197, 2
      %v254 = vsel %vm253, %v251, %v252
      %v255 = vsel %vm253, %v252, %v251
      %vm256 = vcmp.lt.s32.totalorder %v198, 2
      %v257 = vsel %vm253, 1, 0
      %v258 = vsel %vm256, 1, 0
      %vm259 = vcmp.eq.s32.totalorder %v257, 1
      %vm260 = vcmp.eq.s32.totalorder %v258, 1
      %v261 = vsel %vm259, %v231, %v255
      %v262 = vsel %vm260, %v231, %v254
      %v263 = vadd.f32 %v236, %v249
      %v264 = vadd.f32 %v237, %v250
      %v265 = vadd.f32 %v263, %v261
      %v266 = vadd.f32 %v264, %v262
      %v267 = vmul.f32 %v265, 0.2
      %v268 = vmul.f32 %v266, 0.2
      %vm269 = vcmask 64512
      %270 = vst.msk [vmem:[%s195] sm:$0xff] %vm269, %v267
      %271 = vst.msk [vmem:[%s195 + $0x8] sm:$0xff] %vm269, %v268
      %v272 = vsub.f32 %v199, %v267
      %v273 = vsub.f32 %v200, %v268
      %274 = vst.msk [vmem:[%s187] sm:$0xff] %vm269, %v272
      %275 = vst.msk [vmem:[%s187 + $0x8] sm:$0xff] %vm269, %v273
      %p276 = scmp.lt.s32.totalorder %s18, 1
      %s277 = scalar_select %p276, %s18, 1
      %p278 = scmp.lt.s32.totalorder %s19, 0
      %s279 = scalar_select %p278, %s19, 0
      %s280 = smul.addr %s277, 2
      %s281 = sadd.s32 %s279, %s280
      %s282 = smul.addr %s281, 8
      %s283 = scalar_lea.vmem %s1, %s282
      %p284 = scmp.lt.s32.totalorder %s18, 1
      %s285 = scalar_select %p284, %s18, 1
      %p286 = scmp.lt.s32.totalorder %s19, 0
      %s287 = scalar_select %p286, %s19, 0
      %s288 = smul.addr %s285, 2
      %s289 = sadd.s32 %s287, %s288
      %s290 = smul.addr %s289, 8
      %s291 = scalar_lea.vmem %s2, %s290
      // Predicated region
      $region25: #{tpu_custom_call.1} parent=23 // pred_check
        %p292 = pneg %p74
      $region26: #{tpu_custom_call.1} parent=23 // pred_check_branch
        %294 = sbr.rel (%p292) target = $region28
      $region27: #{tpu_custom_call.1} parent=23 // pred_region
        _
      $region28: #{tpu_custom_call.1} parent=23 // pred_fallthru
        _
      // Predicated region
      $region29: #{tpu_custom_call.1} parent=23 // pred_check
        %p295 = pneg %p102
      $region30: #{tpu_custom_call.1} parent=23 // pred_check_branch
        %297 = sbr.rel (%p295) target = $region32
      $region31: #{tpu_custom_call.1} parent=23 // pred_region
        _
      $region32: #{tpu_custom_call.1} parent=23 // pred_fallthru
        _
    $region24: #{tpu_custom_call.1} parent=5 // pred_fallthru
      _
    %p298 = scmp.le.s32.totalorder 2, %s9
    // Predicated region
    $region33: #{tpu_custom_call.1} parent=5 // pred_check
      %p299 = pneg %p298
    $region34: #{tpu_custom_call.1} parent=5 // pred_check_branch
      %301 = sbr.rel (%p299) target = $region36
    $region35: #{tpu_custom_call.1} parent=5 // pred_region
      %s302 = ssub.s32 %s9, 2
      // Predicated region
      $region37: #{tpu_custom_call.1} parent=35 // pred_check
        %p303 = pneg %p80
      $region38: #{tpu_custom_call.1} parent=35 // pred_check_branch
        %305 = sbr.rel (%p303) target = $region40
      $region39: #{tpu_custom_call.1} parent=35 // pred_region
        %p306 = scmp.lt.s32.totalorder %s20, 1
        %s307 = scalar_select %p306, %s20, 1
        %p308 = scmp.lt.s32.totalorder %s21, 0
        %s309 = scalar_select %p308, %s21, 0
        %s310 = smul.addr %s307, 2
        %s311 = sadd.s32 %s309, %s310
        %s312 = smul.addr %s311, 8
        %s313 = scalar_lea.vmem %s1, %s312
      $region40: #{tpu_custom_call.1} parent=35 // pred_fallthru
        _
      // Predicated region
      $region41: #{tpu_custom_call.1} parent=35 // pred_check
        %p314 = pneg %p108
      $region42: #{tpu_custom_call.1} parent=35 // pred_check_branch
        %316 = sbr.rel (%p314) target = $region44
      $region43: #{tpu_custom_call.1} parent=35 // pred_region
        %p317 = scmp.lt.s32.totalorder %s20, 1
        %s318 = scalar_select %p317, %s20, 1
        %p319 = scmp.lt.s32.totalorder %s21, 0
        %s320 = scalar_select %p319, %s21, 0
        %s321 = smul.addr %s318, 2
        %s322 = sadd.s32 %s320, %s321
        %s323 = smul.addr %s322, 8
        %s324 = scalar_lea.vmem %s2, %s323
      $region44: #{tpu_custom_call.1} parent=35 // pred_fallthru
        _
    $region36: #{tpu_custom_call.1} parent=5 // pred_fallthru
      _
  $region6: #{tpu_custom_call.1} parent=0 // loop_footer
    %s13 = sadd.s32 1, %s9
  $region7: #{tpu_custom_call.1} parent=0 // loop_footer_branch
    %8 = sbr.rel target = $region3
  $region8: #{tpu_custom_call.1} parent=0 // loop_exit
    _

</llo_original>
